<compile_context>
chip_gen: v5e
topology: v5e:2x2
jax: 0.10.0
libtpu: 0.0.40
codegen_flags: <defaults>
</compile_context>

<pallas_src>
import jax
import jax.numpy as jnp
from jax.experimental import pallas as pl
from jax.experimental.pallas import tpu as pltpu

EPS = 1e-6


def _int_pow(x, n):
    """x**n for a small static positive integer n via VPU multiplies (no EUP)."""
    result = None
    base = x
    while n > 0:
        if n & 1:
            result = base if result is None else result * base
        n >>= 1
        if n:
            base = base * base
    return result


def _make_gem_kernel(tm, s, eps, p_static):
    def kernel(p_ref, x_ref, o_ref):
        # p_ref: SMEM (2,) f32 -> [p, 1/p]   (unused on the static-p fast path)
        # x_ref: VMEM (tm, s) row tile of the flattened input
        # o_ref: VMEM (tm, 1) pooled output
        x = x_ref[...].astype(jnp.float32)
        x = jnp.maximum(x, eps)                       # clamp(min=eps)

        if p_static is not None:
            y = _int_pow(x, p_static)                 # VPU-only power
            inv_p = jnp.float32(1.0 / p_static)
        else:
            p = p_ref[0]
            inv_p = p_ref[1]                          # precomputed 1/p
            y = jnp.power(x, p)                       # EUP log+exp path

        # Reduction over the volume: bulk of the adds on the VPU, one XLU pass.
        if s % 128 == 0:
            folded = y.reshape(tm, s // 128, 128)
            partial = jnp.sum(folded, axis=1)                   # (tm, 128) VPU
            acc = jnp.sum(partial, axis=-1, keepdims=True)      # (tm, 1)  XLU
        else:
            acc = jnp.sum(y, axis=-1, keepdims=True)

        m = acc * jnp.float32(1.0 / s)                # mean over full volume
        o_ref[...] = jnp.power(m, inv_p).astype(o_ref.dtype)    # ^(1/p)

    return kernel


def _round_up(v, m):
    return (v + m - 1) // m * m


def gem_layer(x, p, eps=EPS):
    """GeM pooling. x: (N, C, D, H, W); p: scalar (array or Python number).

    Returns (N, C, 1, 1, 1), matching avg_pool3d(clamp(x,eps)^p)^(1/p).
    """
    N, C, D, H, W = x.shape
    rows = N * C
    S = D * H * W
    x2 = x.reshape(rows, S)
    itemsize = jnp.dtype(x.dtype).itemsize

    # Static fast path when p is a plain small positive integer (e.g. p=3).
    p_static = None
    if isinstance(p, (int, float)) and not isinstance(p, bool):
        pf = float(p)
        if pf > 0 and pf == int(pf) and int(pf) <= 16:
            p_static = int(pf)

    p_val = jnp.asarray(p, dtype=jnp.float32).reshape(())
    p_arr = jnp.stack([p_val, 1.0 / p_val])          # [p, 1/p] once, in SMEM

    # Row-tile size: ~4 MiB per input tile (double-buffered by the pipeline),
    # a multiple of 8 sublanes, capped at 1024 rows and the (padded) row count.
    target_tile_bytes = 4 * 1024 * 1024
    tm = target_tile_bytes // max(1, S * itemsize)
    tm = int(max(8, min(1024, (tm // 8) * 8)))
    tm = min(tm, _round_up(rows, 8))

    rows_pad = _round_up(rows, tm)
    if rows_pad != rows:
        # Padded rows are trimmed after the call; pad value just avoids inf/nan.
        x2 = jnp.pad(x2, ((0, rows_pad - rows), (0, 0)), constant_values=1.0)
    num_tiles = rows_pad // tm

    kernel = _make_gem_kernel(tm, S, float(eps), p_static)

    out = pl.pallas_call(
        kernel,
        out_shape=jax.ShapeDtypeStruct((rows_pad, 1), x.dtype),
        grid=(num_tiles,),
        in_specs=[
            pl.BlockSpec(memory_space=pltpu.MemorySpace.SMEM),    # [p, 1/p]
            pl.BlockSpec((tm, S), lambda i: (i, 0)),              # row tile
        ],
        out_specs=pl.BlockSpec((tm, 1), lambda i: (i, 0)),
        compiler_params=pltpu.CompilerParams(
            dimension_semantics=("parallel",),      # megacore sharding on v7x
            vmem_limit_bytes=32 * 1024 * 1024,
        ),
    )(p_arr, x2)

    return out[:rows].reshape(N, C, 1, 1, 1)


if __name__ == "__main__":
    key = jax.random.PRNGKey(0)
    N, C, D, H, W = 2, 4, 4, 8, 8
    x = jax.random.uniform(key, (N, C, D, H, W), dtype=jnp.float32)

    def reference(xx, pp):
        return jnp.power(
            jnp.mean(jnp.power(jnp.maximum(xx, EPS), pp), axis=(2, 3, 4),
                     keepdims=True),
            1.0 / pp,
        )

    # Generic path: runtime (learnable) exponent held in SMEM.
    p_param = jnp.asarray(3.0, dtype=jnp.float32)   # nn.Parameter(ones(1)*3)
    y_generic = jax.block_until_ready(gem_layer(x, p_param))
    assert y_generic.shape == (N, C, 1, 1, 1)
    assert jnp.allclose(y_generic, reference(x, 3.0), rtol=1e-4, atol=1e-5), \
        "generic-p path mismatch vs reference"

    # Static fast path: p known at trace time -> VPU multiplies instead of pow.
    y_static = jax.block_until_ready(gem_layer(x, 3))
    assert jnp.allclose(y_static, reference(x, 3.0), rtol=1e-4, atol=1e-5), \
        "static-p path mismatch vs reference"

    # Ragged shapes exercise row padding and the non-128-multiple lane width.
    x2 = jax.random.uniform(jax.random.PRNGKey(1), (3, 5, 3, 7, 7),
                            dtype=jnp.float32)
    y2 = jax.block_until_ready(gem_layer(x2, p_param))
    assert y2.shape == (3, 5, 1, 1, 1)
    assert jnp.allclose(y2, reference(x2, 3.0), rtol=1e-4, atol=1e-5), \
        "ragged-shape path mismatch vs reference"

    print("KERNEL_OK")
</pallas_src>

<mosaic_0001>
module attributes {stable_mosaic.version = 11 : i64} {
  func.func @kernel(%arg0: i32, %arg1: memref<2xf32, #tpu.memory_space<smem>>, %arg2: memref<8x256xf32, #tpu.memory_space<vmem>>, %arg3: memref<8x1xf32, #tpu.memory_space<vmem>>) attributes {dimension_semantics = [#tpu.dimension_semantics<parallel>], iteration_bounds = array<i64: 1>, scalar_prefetch = 0 : i64, scratch_operands = 0 : i64, tpu.core_type = #tpu.core_type<tc>, window_params = [{transform_indices = @transform_0, window_bounds = array<i64: 2>}, {transform_indices = @transform_1, window_bounds = array<i64: 8, 256>}, {transform_indices = @transform_2, window_bounds = array<i64: 8, 1>}]} {
    %c0 = arith.constant 0 : index
    %c0_0 = arith.constant 0 : index
    %0 = vector.load %arg2[%c0, %c0_0] : memref<8x256xf32, #tpu.memory_space<vmem>>, vector<8x256xf32>
    %cst = arith.constant 9.99999997E-7 : f32
    %1 = vector.broadcast %cst : f32 to vector<8x256xf32>
    %2 = arith.maximumf %0, %1 : vector<8x256xf32>
    %c0_1 = arith.constant 0 : index
    %3 = memref.load %arg1[%c0_1] : memref<2xf32, #tpu.memory_space<smem>>
    %c1 = arith.constant 1 : index
    %4 = memref.load %arg1[%c1] : memref<2xf32, #tpu.memory_space<smem>>
    %5 = vector.broadcast %3 : f32 to vector<8x256xf32>
    %6 = math.powf %2, %5 : vector<8x256xf32>
    %7 = vector.shape_cast %6 : vector<8x256xf32> to vector<8x2x128xf32>
    %cst_2 = arith.constant dense<0.000000e+00> : vector<8x128xf32>
    %8 = vector.multi_reduction <add>, %7, %cst_2 [1] : vector<8x2x128xf32> to vector<8x128xf32>
    %cst_3 = arith.constant dense<0.000000e+00> : vector<8xf32>
    %9 = vector.multi_reduction <add>, %8, %cst_3 [1] : vector<8x128xf32> to vector<8xf32>
    %10 = vector.shape_cast %9 : vector<8xf32> to vector<8x1xf32>
    %cst_4 = arith.constant 3.906250e-03 : f32
    %11 = vector.broadcast %cst_4 : f32 to vector<8x1xf32>
    %12 = arith.mulf %10, %11 : vector<8x1xf32>
    %13 = vector.broadcast %4 : f32 to vector<8x1xf32>
    %14 = math.powf %12, %13 : vector<8x1xf32>
    %c0_5 = arith.constant 0 : index
    %c0_6 = arith.constant 0 : index
    %15 = vector.load %arg3[%c0_5, %c0_6] : memref<8x1xf32, #tpu.memory_space<vmem>>, vector<8x1xf32>
    tpu.vector_store %arg3[%c0_5, %c0_6], %14 {strides = array<i32>} : memref<8x1xf32, #tpu.memory_space<vmem>>, vector<8x1xf32>,
    return
  }
  func.func @transform_0(%arg0: i32) -> i32 {
    %c0_i32 = arith.constant 0 : i32
    %c0_i32_0 = arith.constant 0 : i32
    return %c0_i32 : i32
  }
  func.func @transform_1(%arg0: i32) -> (i32, i32) {
    %c0_i32 = arith.constant 0 : i32
    %c0_i32_0 = arith.constant 0 : i32
    return %arg0, %c0_i32 : i32, i32
  }
  func.func @transform_2(%arg0: i32) -> (i32, i32) {
    %c0_i32 = arith.constant 0 : i32
    %c0_i32_0 = arith.constant 0 : i32
    return %arg0, %c0_i32 : i32, i32
  }
}

</mosaic_0001>

<llo_original>
// kernel: tpu_custom_call.1
$region0: #{tpu_custom_call.1}
  #allocation0 [shape = 'u32[]', space=smem, size = 0x4, offset = 0x4, fixed_abs, tag = 'smem constant byte address 0x4 - core index']
  #allocation1 [shape = 'u32[72,128]{1,0:T(1,128)}', space=vmem, size = 0x9000, scoped, tag = 'internal scratch']
  %s0 = inlined_call_operand.hbm [shape: f32[2], index: 0, kind: input, shape index: {}]
  %s1 = inlined_call_operand.hbm [shape: f32[8,256], index: 1, kind: input, shape index: {}]
  %s2 = inlined_call_operand.vmem [shape: f32[8,1], index: 2, kind: output, shape index: {}]
  %s3 = sld [smem:[#allocation0]]
  $region26: #{tpu_custom_call.1} parent=0
    _
  %s5 = ssub.s32 1, %s3
  %s6 = scalar_select 0, %s5, %s3
  $region1: #{tpu_custom_call.1} parent=0
    #allocation2 [shape = 'u8[512]{0}', space=smem, size = 0x200, scoped, tag = 'input window, operand 0, single buffered']
    #allocation3 [shape = 's32[1]{0}', space=sflag, size = 0x4, scoped, tag = 'scoped memory for tpu_custom_call.1']
    #allocation4 [shape = 's32[1]{0}', space=sflag, size = 0x4, scoped, tag = 'scoped memory for tpu_custom_call.1']
    #allocation5 [shape = 'u8[8192]{0}', space=vmem, size = 0x2000, scoped, tag = 'input window, operand 1, single buffered']
    %7 = vsyncpa [#allocation4], 0
    %8 = vsyncpa [#allocation3], 0
    // Predicated region
    $region2: #{tpu_custom_call.1} parent=1 // pred_check
      _
    $region3: #{tpu_custom_call.1} parent=1 // pred_check_branch
      %10 = sbr.rel (0) target = $region5
    $region4: #{tpu_custom_call.1} parent=1 // pred_region
      %12 = vsyncadd [#allocation4], 0
      %s14 = sshll.u32 %s0, 4
      %s15 = int_to_ptr.hbm [resolvable:$true] %s14
      %17 = dma.hbm_to_smem %s15, 16, [#allocation2], [#allocation4]
    $region5: #{tpu_custom_call.1} parent=1 // pred_fallthru
      _
    // Predicated region
    $region6: #{tpu_custom_call.1} parent=1 // pred_check
      _
    $region7: #{tpu_custom_call.1} parent=1 // pred_check_branch
      %19 = sbr.rel (0) target = $region9
    $region8: #{tpu_custom_call.1} parent=1 // pred_region
      %21 = vsyncadd [#allocation3], 0
      %s23 = sshll.u32 %s1, 4
      %s24 = int_to_ptr.hbm [resolvable:$true] %s23
      %s25 = sshll.u32 [#allocation5], 4
      %s26 = int_to_ptr.vmem [resolvable:$true] %s25
      %28 = dma.hbm_to_vmem [thread:$0]  %s24, 256, %s26, [#allocation3]
    $region9: #{tpu_custom_call.1} parent=1 // pred_fallthru
      _
    // Predicated region
    $region10: #{tpu_custom_call.1} parent=1 // pred_check
      _
    $region11: #{tpu_custom_call.1} parent=1 // pred_check_branch
      %30 = sbr.rel (0) target = $region13
    $region12: #{tpu_custom_call.1} parent=1 // pred_region
      %32 = dma.done [#allocation4], 16
    $region13: #{tpu_custom_call.1} parent=1 // pred_fallthru
      _
    // Predicated region
    $region14: #{tpu_custom_call.1} parent=1 // pred_check
      _
    $region15: #{tpu_custom_call.1} parent=1 // pred_check_branch
      %34 = sbr.rel (0) target = $region17
    $region16: #{tpu_custom_call.1} parent=1 // pred_region
      %36 = dma.done [#allocation3], 256
    $region17: #{tpu_custom_call.1} parent=1 // pred_fallthru
      _
    %37 = sfence
    %v38 = vld [vmem:[#allocation5] sm:$0xff]
    %v39 = vld [vmem:[#allocation5 + $0x8] sm:$0xff]
    %v40 = vmax.f32 %v38, 1e-06
    %v41 = vmax.f32 %v39, 1e-06
    %s42 = sld [smem:[#allocation2]]
    %s43 = sld [smem:[#allocation2 + $0x1]]
    %v44 = vstv %s42
    %v45 = vpow.f32 %v40, %v44
    %v46 = vpow.f32 %v41, %v44
    %v47 = vrot.slane %v45, 4
    %vm48 = vcmask 1047556
    %v49 = vsel %vm48, 0.0, %v47
    %v51 = vunpack.c.l.s4 1983009808
    %v52 = vunpack.c.0.s8 %v51
    %v53 = vperm.slane %v45, %v52
    %v55 = vunpack.c.l.s4 1983009808
    %v56 = vunpack.c.0.s8 %v55
    %v57 = vperm.slane %v49, %v56
    %v58 = vrot.slane %v46, 4
    %v59 = vsel %vm48, 0.0, %v58
    %v61 = vunpack.c.l.s4 1983009808
    %v62 = vunpack.c.0.s8 %v61
    %v63 = vperm.slane %v46, %v62
    %v65 = vunpack.c.l.s4 1983009808
    %v66 = vunpack.c.0.s8 %v65
    %v67 = vperm.slane %v59, %v66
    %v68 = vrot.slane %v63, 4
    %v69 = vsel %vm48, %v68, %v53
    %v70 = vrot.slane %v53, 4
    %v71 = vsel %vm48, %v63, %v70
    %v73 = vunpack.c.l.s4 1934713408
    %v74 = vunpack.c.0.s8 %v73
    %v75 = vperm.slane %v69, %v74
    %v77 = vunpack.c.l.s4 1934713408
    %v78 = vunpack.c.0.s8 %v77
    %v79 = vperm.slane %v71, %v78
    %v80 = vrot.slane %v67, 4
    %v81 = vsel %vm48, %v80, %v57
    %v82 = vrot.slane %v57, 4
    %v83 = vsel %vm48, %v67, %v82
    %v85 = vunpack.c.l.s4 1934713408
    %v86 = vunpack.c.0.s8 %v85
    %v87 = vperm.slane %v81, %v86
    %v89 = vunpack.c.l.s4 1934713408
    %v90 = vunpack.c.0.s8 %v89
    %v91 = vperm.slane %v83, %v90
    %v92 = vrot.slane %v75, 4
    %v93 = vsel %vm48, 0.0, %v92
    %v94 = vrot.slane %v79, 4
    %v95 = vsel %vm48, 0.0, %v94
    %v96 = vrot.slane %v87, 4
    %v97 = vsel %vm48, 0.0, %v96
    %v98 = vrot.slane %v91, 4
    %v99 = vsel %vm48, 0.0, %v98
    %vm100 = vcmask 1041408
    %v101 = vsel %vm100, %v75, 0.0
    %v102 = vrot.slane %v101, 4
    %v103 = vadd.f32 %v101, %v102
    %v104 = vrot.slane %v103, 2
    %v105 = vadd.f32 %v103, %v104
    %v106 = vrot.slane %v105, 1
    %v107 = vadd.f32 %v105, %v106
    %v108 = vsel %vm100, %v93, 0.0
    %v109 = vrot.slane %v108, 4
    %v110 = vadd.f32 %v108, %v109
    %v111 = vrot.slane %v110, 2
    %v112 = vadd.f32 %v110, %v111
    %v113 = vrot.slane %v112, 1
    %v114 = vadd.f32 %v112, %v113
    %v115 = vsel %vm100, %v79, 0.0
    %v116 = vrot.slane %v115, 4
    %v117 = vadd.f32 %v115, %v116
    %v118 = vrot.slane %v117, 2
    %v119 = vadd.f32 %v117, %v118
    %v120 = vrot.slane %v119, 1
    %v121 = vadd.f32 %v119, %v120
    %v122 = vsel %vm100, %v95, 0.0
    %v123 = vrot.slane %v122, 4
    %v124 = vadd.f32 %v122, %v123
    %v125 = vrot.slane %v124, 2
    %v126 = vadd.f32 %v124, %v125
    %v127 = vrot.slane %v126, 1
    %v128 = vadd.f32 %v126, %v127
    %v129 = vsel %vm100, %v87, 0.0
    %v130 = vrot.slane %v129, 4
    %v131 = vadd.f32 %v129, %v130
    %v132 = vrot.slane %v131, 2
    %v133 = vadd.f32 %v131, %v132
    %v134 = vrot.slane %v133, 1
    %v135 = vadd.f32 %v133, %v134
    %v136 = vsel %vm100, %v97, 0.0
    %v137 = vrot.slane %v136, 4
    %v138 = vadd.f32 %v136, %v137
    %v139 = vrot.slane %v138, 2
    %v140 = vadd.f32 %v138, %v139
    %v141 = vrot.slane %v140, 1
    %v142 = vadd.f32 %v140, %v141
    %v143 = vsel %vm100, %v91, 0.0
    %v144 = vrot.slane %v143, 4
    %v145 = vadd.f32 %v143, %v144
    %v146 = vrot.slane %v145, 2
    %v147 = vadd.f32 %v145, %v146
    %v148 = vrot.slane %v147, 1
    %v149 = vadd.f32 %v147, %v148
    %v150 = vsel %vm100, %v99, 0.0
    %v151 = vrot.slane %v150, 4
    %v152 = vadd.f32 %v150, %v151
    %v153 = vrot.slane %v152, 2
    %v154 = vadd.f32 %v152, %v153
    %v155 = vrot.slane %v154, 1
    %v156 = vadd.f32 %v154, %v155
    %vm165 = vcmask 1041409
    %v166 = vsel %vm165, %v114, %v107
    %vm167 = vcmask 1042434
    %v168 = vsel %vm167, %v121, %v166
    %vm169 = vcmask 1043459
    %v170 = vsel %vm169, %v128, %v168
    %vm171 = vcmask 1044484
    %v172 = vsel %vm171, %v135, %v170
    %vm173 = vcmask 1045509
    %v174 = vsel %vm173, %v142, %v172
    %vm175 = vcmask 1046534
    %v176 = vsel %vm175, %v149, %v174
    %vm177 = vcmask 1047559
    %v178 = vsel %vm177, %v156, %v176
    %180 = vadd.xlane.f32.xlu0 %v178
    %v181 = vpop.xlane.xlu0 %180
    %v182 = vmul.f32 %v181, 0.00390625
    %v183 = vstv %s43
    %v184 = vpow.f32 %v182, %v183
    %vm185 = vcmask 7168
    %186 = vst.msk [vmem:[%s2] sm:$0xff] %vm185, %v184
    // Predicated region
    $region18: #{tpu_custom_call.1} parent=1 // pred_check
      _
    $region19: #{tpu_custom_call.1} parent=1 // pred_check_branch
      %188 = sbr.rel (0) target = $region21
    $region20: #{tpu_custom_call.1} parent=1 // pred_region
      _
    $region21: #{tpu_custom_call.1} parent=1 // pred_fallthru
      _
    // Predicated region
    $region22: #{tpu_custom_call.1} parent=1 // pred_check
      _
    $region23: #{tpu_custom_call.1} parent=1 // pred_check_branch
      %190 = sbr.rel (0) target = $region25
    $region24: #{tpu_custom_call.1} parent=1 // pred_region
      _
    $region25: #{tpu_custom_call.1} parent=1 // pred_fallthru
      _
    %191 = vsyncpa [#allocation3], 1
    %192 = vsyncpa [#allocation4], 1

</llo_original>
